<compile_context>
chip_gen: v7x
topology: tpu7x:2x2x1
jax: 0.10.0
libtpu: 0.0.40
codegen_flags: <defaults>
</compile_context>

<pallas_src>
import jax
import jax.numpy as jnp
from jax import lax
from jax.experimental import pallas as pl
from jax.experimental.pallas import tpu as pltpu

EPS = 1e-5
_CHUNK = 8  # sublane granularity of the sequential scan


def ssm_kernel(x_ref, nw_ref, w4_ref, b4_ref, wo_ref, out_ref,
               a_s, bx_s, hcarry):
    """Processes one (batch, L-tile) per grid step."""
    TL = x_ref.shape[1]
    N = a_s.shape[1]

    # Reset the recurrent carry at the first sequence tile of each batch elem.
    @pl.when(pl.program_id(1) == 0)
    def _():
        hcarry[...] = jnp.zeros_like(hcarry)

    x_orig = x_ref[0].astype(jnp.float32)                       # (TL, D)

    # --- RMSNorm: x * weight * rsqrt(mean(x^2) + eps)  (rsqrt -> EUP) ---
    ms = jnp.mean(x_orig * x_orig, axis=-1, keepdims=True)      # (TL, 1)
    xn = (x_orig * lax.rsqrt(ms + EPS)) * nw_ref[...]           # (TL, D) f32
    xn_b = xn.astype(jnp.bfloat16)                              # MXU input

    # --- Fused projections: one (TL, D) x (D, 4N) bf16 matmul, f32 acc ---
    p = jnp.dot(xn_b, w4_ref[...], preferred_element_type=jnp.float32)
    p = p + b4_ref[...]                          # only A_proj has a bias
    a = jax.nn.sigmoid(p[:, 0:N])                # sigmoid(A_proj(x))
    xe = p[:, N:2 * N]                           # x_proj(x)
    side = jax.nn.sigmoid(p[:, 2 * N:3 * N])     # sigmoid(output_proj(x))
    gate = jax.nn.sigmoid(p[:, 3 * N:4 * N])     # sigmoid(sidegate_proj(x))

    # Stage scan operands in VMEM scratch (f32 recurrence).
    a_s[...] = a
    bx_s[...] = side * xe

    # --- Sequential recurrence, 8 rows per chunk; h overwrites a_s in place ---
    def chunk_body(c, h):                        # h: (1, N) f32
        base = pl.multiple_of(c * _CHUNK, _CHUNK)
        a_c = a_s[pl.ds(base, _CHUNK), :]        # (8, N)
        bx_c = bx_s[pl.ds(base, _CHUNK), :]      # (8, N)
        rows = []
        for r in range(_CHUNK):                  # statically unrolled
            h = a_c[r:r + 1, :] * h + bx_c[r:r + 1, :]
            rows.append(h)
        a_s[pl.ds(base, _CHUNK), :] = jnp.concatenate(rows, axis=0)
        return h

    h_last = lax.fori_loop(0, TL // _CHUNK, chunk_body, hcarry[...])
    hcarry[...] = h_last                         # carry into the next L-tile

    # --- y = gate * h (single vectorized pass), wo projection, residual ---
    y = (gate * a_s[...]).astype(jnp.bfloat16)
    out = jnp.dot(y, wo_ref[...], preferred_element_type=jnp.float32)
    out_ref[0] = (out + x_orig).astype(out_ref.dtype)


def ssm_forward(x, params, *, seq_tile=None, vmem_limit_bytes=None):
    B, L, D = x.shape
    N = params["wA"].shape[1]
    if seq_tile is None:
        seq_tile = L
    assert L & (L - 1) == 0, "L must be a power of 2"
    assert L % seq_tile == 0 and seq_tile % _CHUNK == 0

    # Fuse the four D->N projections into one lane-dense (D, 4N) bf16 weight.
    # Column order matches the in-kernel slicing: [A | x | output | sidegate].
    w4 = jnp.concatenate(
        [params["wA"], params["wX"], params["wO"], params["wS"]],
        axis=1).astype(jnp.bfloat16)
    b4 = jnp.concatenate(
        [params["bA"], jnp.zeros((1, 3 * N), jnp.float32)], axis=1)
    wo = params["wWo"].astype(jnp.bfloat16)

    def const_spec(shape):
        # Same block for every grid step -> Pallas skips re-DMA on revisits.
        return pl.BlockSpec(shape, lambda b, l: (0,) * len(shape))

    cp_kwargs = dict(dimension_semantics=("parallel", "arbitrary"))
    if vmem_limit_bytes is not None:
        cp_kwargs["vmem_limit_bytes"] = vmem_limit_bytes

    return pl.pallas_call(
        ssm_kernel,
        out_shape=jax.ShapeDtypeStruct((B, L, D), x.dtype),
        grid_spec=pltpu.PrefetchScalarGridSpec(
            num_scalar_prefetch=0,
            grid=(B, L // seq_tile),
            in_specs=[
                pl.BlockSpec((1, seq_tile, D), lambda b, l: (b, l, 0)),  # x
                const_spec((1, D)),          # RMSNorm weight (f32)
                const_spec((D, 4 * N)),      # fused projection weight (bf16)
                const_spec((1, 4 * N)),      # fused bias (only A_proj's is nonzero)
                const_spec((N, D)),          # wo weight (bf16)
            ],
            out_specs=pl.BlockSpec((1, seq_tile, D), lambda b, l: (b, l, 0)),
            scratch_shapes=[
                pltpu.VMEM((seq_tile, N), jnp.float32),   # a, reused for h
                pltpu.VMEM((seq_tile, N), jnp.float32),   # b*x
                pltpu.VMEM((1, N), jnp.float32),          # h carry across L-tiles
            ],
        ),
        compiler_params=pltpu.CompilerParams(**cp_kwargs),
    )(x, params["norm_w"], w4, b4, wo)


def ssm_reference(x, params):
    """Pure-JAX reference (same bf16-at-MXU numerics as the kernel)."""
    xf = x.astype(jnp.float32)
    ms = jnp.mean(xf * xf, axis=-1, keepdims=True)
    xn = ((xf * lax.rsqrt(ms + EPS)) * params["norm_w"]).astype(jnp.bfloat16)

    def proj(w):
        return jnp.dot(xn, w.astype(jnp.bfloat16),
                       preferred_element_type=jnp.float32)

    a = jax.nn.sigmoid(proj(params["wA"]) + params["bA"])
    xe = proj(params["wX"])
    side = jax.nn.sigmoid(proj(params["wO"]))   # sidegate_elements
    gate = jax.nn.sigmoid(proj(params["wS"]))   # gate

    def step(h, inp):
        a_t, bx_t, c_t = inp
        h = a_t * h + bx_t
        return h, c_t * h

    def scan_one(a_i, bx_i, c_i):
        _, y = lax.scan(step, jnp.zeros((a_i.shape[-1],), jnp.float32),
                        (a_i, bx_i, c_i))
        return y

    y = jax.vmap(scan_one)(a, side * xe, gate)
    out = jnp.dot(y.astype(jnp.bfloat16), params["wWo"].astype(jnp.bfloat16),
                  preferred_element_type=jnp.float32)
    return (out + xf).astype(x.dtype)


def init_params(key, D, N):
    ks = jax.random.split(key, 7)
    s = 0.1
    return {
        "norm_w": jnp.ones((1, D), jnp.float32),
        "wA": s * jax.random.normal(ks[0], (D, N), jnp.float32),
        "bA": s * jax.random.normal(ks[1], (1, N), jnp.float32),
        "wX": s * jax.random.normal(ks[2], (D, N), jnp.float32),
        "wS": s * jax.random.normal(ks[3], (D, N), jnp.float32),
        "wO": s * jax.random.normal(ks[4], (D, N), jnp.float32),
        "wWo": s * jax.random.normal(ks[5], (N, D), jnp.float32),
    }


if __name__ == "__main__":
    # Small but TPU-friendly shapes: L is a power of 2 and a multiple of the
    # 8-row scan chunk; D = N = 128 so every vreg / MXU tile is lane-dense.
    B, L, D = 2, 16, 128
    N = int(D * 1.0)            # state_size_mult = 1.0

    key = jax.random.PRNGKey(0)
    kx, kp = jax.random.split(key)
    x = jax.random.normal(kx, (B, L, D), jnp.float32)
    params = init_params(kp, D, N)

    # seq_tile=8 exercises the L-tiled grid with the persistent h carry.
    out = jax.block_until_ready(ssm_forward(x, params, seq_tile=8))
    ref = jax.block_until_ready(ssm_reference(x, params))

    assert out.shape == (B, L, D)
    # bf16 MXU inputs (and EUP rsqrt/exp) => compare at bf16-level tolerance.
    assert jnp.allclose(out, ref, atol=5e-3, rtol=5e-3), (
        "mismatch vs JAX reference: max|diff|="
        + str(float(jnp.max(jnp.abs(out - ref)))))
    print("KERNEL_OK")
</pallas_src>

<mosaic_0001>
module attributes {stable_mosaic.version = 11 : i64} {
  func.func @ssm_kernel(%arg0: i32, %arg1: i32, %arg2: memref<1x8x128xf32, #tpu.memory_space<vmem>>, %arg3: memref<1x128xf32, #tpu.memory_space<vmem>>, %arg4: memref<128x512xbf16, #tpu.memory_space<vmem>>, %arg5: memref<1x512xf32, #tpu.memory_space<vmem>>, %arg6: memref<128x128xbf16, #tpu.memory_space<vmem>>, %arg7: memref<1x8x128xf32, #tpu.memory_space<vmem>>, %arg8: memref<8x128xf32, #tpu.memory_space<vmem>>, %arg9: memref<8x128xf32, #tpu.memory_space<vmem>>, %arg10: memref<1x128xf32, #tpu.memory_space<vmem>>) attributes {dimension_semantics = [#tpu.dimension_semantics<parallel>, #tpu.dimension_semantics<arbitrary>], iteration_bounds = array<i64: 2, 2>, scalar_prefetch = 0 : i64, scratch_operands = 3 : i64, tpu.core_type = #tpu.core_type<tc>, window_params = [{transform_indices = @transform_0, window_bounds = array<i64: 1, 8, 128>}, {pipeline_mode = #tpu.pipeline_mode<synchronous>, transform_indices = @transform_1, window_bounds = array<i64: 1, 128>}, {pipeline_mode = #tpu.pipeline_mode<synchronous>, transform_indices = @transform_2, window_bounds = array<i64: 128, 512>}, {pipeline_mode = #tpu.pipeline_mode<synchronous>, transform_indices = @transform_3, window_bounds = array<i64: 1, 512>}, {pipeline_mode = #tpu.pipeline_mode<synchronous>, transform_indices = @transform_4, window_bounds = array<i64: 128, 128>}, {transform_indices = @transform_5, window_bounds = array<i64: 1, 8, 128>}]} {
    %c0_i32 = arith.constant 0 : i32
    %0 = arith.cmpi eq, %arg1, %c0_i32 : i32
    %1 = arith.extui %0 : i1 to i32
    %c0_i32_0 = arith.constant 0 : i32
    %2 = arith.cmpi ne, %1, %c0_i32_0 : i32
    scf.if %2 {
      %cst_35 = arith.constant 0.000000e+00 : f32
      %98 = vector.broadcast %cst_35 : f32 to vector<1x128xf32>
      %c0_36 = arith.constant 0 : index
      %c0_37 = arith.constant 0 : index
      %99 = vector.load %arg10[%c0_36, %c0_37] : memref<1x128xf32, #tpu.memory_space<vmem>>, vector<1x128xf32>
      tpu.vector_store %arg10[%c0_36, %c0_37], %98 {strides = array<i32>} : memref<1x128xf32, #tpu.memory_space<vmem>>, vector<1x128xf32>,
    } else {
    }
    %c0 = arith.constant 0 : index
    %c0_1 = arith.constant 0 : index
    %c0_2 = arith.constant 0 : index
    %3 = vector.load %arg2[%c0, %c0_1, %c0_2] : memref<1x8x128xf32, #tpu.memory_space<vmem>>, vector<1x8x128xf32>
    %4 = vector.shape_cast %3 : vector<1x8x128xf32> to vector<8x128xf32>
    %5 = arith.mulf %4, %4 : vector<8x128xf32>
    %cst = arith.constant dense<0.000000e+00> : vector<8xf32>
    %6 = vector.multi_reduction <add>, %5, %cst [1] : vector<8x128xf32> to vector<8xf32>
    %7 = vector.shape_cast %6 : vector<8xf32> to vector<8x1xf32>
    %cst_3 = arith.constant 1.280000e+02 : f32
    %8 = vector.broadcast %cst_3 : f32 to vector<8x1xf32>
    %9 = arith.divf %7, %8 : vector<8x1xf32>
    %cst_4 = arith.constant 9.99999974E-6 : f32
    %10 = vector.broadcast %cst_4 : f32 to vector<8x1xf32>
    %11 = arith.addf %9, %10 : vector<8x1xf32>
    %12 = math.rsqrt %11 : vector<8x1xf32>
    %13 = vector.broadcast %12 : vector<8x1xf32> to vector<8x128xf32>
    %14 = arith.mulf %4, %13 : vector<8x128xf32>
    %c0_5 = arith.constant 0 : index
    %c0_6 = arith.constant 0 : index
    %15 = vector.load %arg3[%c0_5, %c0_6] : memref<1x128xf32, #tpu.memory_space<vmem>>, vector<1x128xf32>
    %16 = vector.broadcast %15 : vector<1x128xf32> to vector<8x128xf32>
    %17 = arith.mulf %14, %16 : vector<8x128xf32>
    %18 = arith.truncf %17 : vector<8x128xf32> to vector<8x128xbf16>
    %c0_7 = arith.constant 0 : index
    %c0_8 = arith.constant 0 : index
    %19 = vector.load %arg4[%c0_7, %c0_8] : memref<128x512xbf16, #tpu.memory_space<vmem>>, vector<128x512xbf16>
    %cst_9 = arith.constant dense<0.000000e+00> : vector<8x512xf32>
    %20 = tpu.matmul %18, %19, %cst_9 {dimension_numbers = #tpu.dot_dimension_numbers<[1], [0], [0], [1], [0, 0, 1, 1], [], []>} : vector<8x128xbf16>, vector<128x512xbf16>, vector<8x512xf32> -> vector<8x512xf32>
    %c0_10 = arith.constant 0 : index
    %c0_11 = arith.constant 0 : index
    %21 = vector.load %arg5[%c0_10, %c0_11] : memref<1x512xf32, #tpu.memory_space<vmem>>, vector<1x512xf32>
    %22 = vector.broadcast %21 : vector<1x512xf32> to vector<8x512xf32>
    %23 = arith.addf %20, %22 : vector<8x512xf32>
    %24 = vector.extract_strided_slice %23 {offsets = [0, 0], sizes = [8, 128], strides = [1, 1]} : vector<8x512xf32> to vector<8x128xf32>
    %25 = arith.negf %24 : vector<8x128xf32>
    %26 = math.exp %25 : vector<8x128xf32>
    %cst_12 = arith.constant 1.000000e+00 : f32
    %27 = vector.broadcast %cst_12 : f32 to vector<8x128xf32>
    %28 = arith.addf %27, %26 : vector<8x128xf32>
    %29 = arith.divf %27, %28 : vector<8x128xf32>
    %30 = vector.extract_strided_slice %23 {offsets = [0, 128], sizes = [8, 128], strides = [1, 1]} : vector<8x512xf32> to vector<8x128xf32>
    %31 = vector.extract_strided_slice %23 {offsets = [0, 256], sizes = [8, 128], strides = [1, 1]} : vector<8x512xf32> to vector<8x128xf32>
    %32 = arith.negf %31 : vector<8x128xf32>
    %33 = math.exp %32 : vector<8x128xf32>
    %cst_13 = arith.constant 1.000000e+00 : f32
    %34 = vector.broadcast %cst_13 : f32 to vector<8x128xf32>
    %35 = arith.addf %34, %33 : vector<8x128xf32>
    %36 = arith.divf %34, %35 : vector<8x128xf32>
    %37 = vector.extract_strided_slice %23 {offsets = [0, 384], sizes = [8, 128], strides = [1, 1]} : vector<8x512xf32> to vector<8x128xf32>
    %38 = arith.negf %37 : vector<8x128xf32>
    %39 = math.exp %38 : vector<8x128xf32>
    %cst_14 = arith.constant 1.000000e+00 : f32
    %40 = vector.broadcast %cst_14 : f32 to vector<8x128xf32>
    %41 = arith.addf %40, %39 : vector<8x128xf32>
    %42 = arith.divf %40, %41 : vector<8x128xf32>
    %c0_15 = arith.constant 0 : index
    %c0_16 = arith.constant 0 : index
    %43 = vector.load %arg8[%c0_15, %c0_16] : memref<8x128xf32, #tpu.memory_space<vmem>>, vector<8x128xf32>
    tpu.vector_store %arg8[%c0_15, %c0_16], %29 {strides = array<i32>} : memref<8x128xf32, #tpu.memory_space<vmem>>, vector<8x128xf32>,
    %44 = arith.mulf %36, %30 : vector<8x128xf32>
    %c0_17 = arith.constant 0 : index
    %c0_18 = arith.constant 0 : index
    %45 = vector.load %arg9[%c0_17, %c0_18] : memref<8x128xf32, #tpu.memory_space<vmem>>, vector<8x128xf32>
    tpu.vector_store %arg9[%c0_17, %c0_18], %44 {strides = array<i32>} : memref<8x128xf32, #tpu.memory_space<vmem>>, vector<8x128xf32>,
    %c0_19 = arith.constant 0 : index
    %c0_20 = arith.constant 0 : index
    %46 = vector.load %arg10[%c0_19, %c0_20] : memref<1x128xf32, #tpu.memory_space<vmem>>, vector<1x128xf32>
    %c0_i32_21 = arith.constant 0 : i32
    %c8_i32 = arith.constant 8 : i32
    %47 = arith.muli %c0_i32_21, %c8_i32 : i32
    %48 = tpu.assume_multiple %47, 8 : i32
    %49 = arith.index_cast %48 : i32 to index
    %c0_22 = arith.constant 0 : index
    %50 = vector.load %arg8[%49, %c0_22] : memref<8x128xf32, #tpu.memory_space<vmem>>, vector<8x128xf32>
    %51 = arith.index_cast %48 : i32 to index
    %c0_23 = arith.constant 0 : index
    %52 = vector.load %arg9[%51, %c0_23] : memref<8x128xf32, #tpu.memory_space<vmem>>, vector<8x128xf32>
    %53 = vector.extract_strided_slice %50 {offsets = [0, 0], sizes = [1, 128], strides = [1, 1]} : vector<8x128xf32> to vector<1x128xf32>
    %54 = arith.mulf %53, %46 : vector<1x128xf32>
    %55 = vector.extract_strided_slice %52 {offsets = [0, 0], sizes = [1, 128], strides = [1, 1]} : vector<8x128xf32> to vector<1x128xf32>
    %56 = arith.addf %54, %55 : vector<1x128xf32>
    %57 = vector.extract_strided_slice %50 {offsets = [1, 0], sizes = [1, 128], strides = [1, 1]} : vector<8x128xf32> to vector<1x128xf32>
    %58 = arith.mulf %57, %56 : vector<1x128xf32>
    %59 = vector.extract_strided_slice %52 {offsets = [1, 0], sizes = [1, 128], strides = [1, 1]} : vector<8x128xf32> to vector<1x128xf32>
    %60 = arith.addf %58, %59 : vector<1x128xf32>
    %61 = vector.extract_strided_slice %50 {offsets = [2, 0], sizes = [1, 128], strides = [1, 1]} : vector<8x128xf32> to vector<1x128xf32>
    %62 = arith.mulf %61, %60 : vector<1x128xf32>
    %63 = vector.extract_strided_slice %52 {offsets = [2, 0], sizes = [1, 128], strides = [1, 1]} : vector<8x128xf32> to vector<1x128xf32>
    %64 = arith.addf %62, %63 : vector<1x128xf32>
    %65 = vector.extract_strided_slice %50 {offsets = [3, 0], sizes = [1, 128], strides = [1, 1]} : vector<8x128xf32> to vector<1x128xf32>
    %66 = arith.mulf %65, %64 : vector<1x128xf32>
    %67 = vector.extract_strided_slice %52 {offsets = [3, 0], sizes = [1, 128], strides = [1, 1]} : vector<8x128xf32> to vector<1x128xf32>
    %68 = arith.addf %66, %67 : vector<1x128xf32>
    %69 = vector.extract_strided_slice %50 {offsets = [4, 0], sizes = [1, 128], strides = [1, 1]} : vector<8x128xf32> to vector<1x128xf32>
    %70 = arith.mulf %69, %68 : vector<1x128xf32>
    %71 = vector.extract_strided_slice %52 {offsets = [4, 0], sizes = [1, 128], strides = [1, 1]} : vector<8x128xf32> to vector<1x128xf32>
    %72 = arith.addf %70, %71 : vector<1x128xf32>
    %73 = vector.extract_strided_slice %50 {offsets = [5, 0], sizes = [1, 128], strides = [1, 1]} : vector<8x128xf32> to vector<1x128xf32>
    %74 = arith.mulf %73, %72 : vector<1x128xf32>
    %75 = vector.extract_strided_slice %52 {offsets = [5, 0], sizes = [1, 128], strides = [1, 1]} : vector<8x128xf32> to vector<1x128xf32>
    %76 = arith.addf %74, %75 : vector<1x128xf32>
    %77 = vector.extract_strided_slice %50 {offsets = [6, 0], sizes = [1, 128], strides = [1, 1]} : vector<8x128xf32> to vector<1x128xf32>
    %78 = arith.mulf %77, %76 : vector<1x128xf32>
    %79 = vector.extract_strided_slice %52 {offsets = [6, 0], sizes = [1, 128], strides = [1, 1]} : vector<8x128xf32> to vector<1x128xf32>
    %80 = arith.addf %78, %79 : vector<1x128xf32>
    %81 = vector.extract_strided_slice %50 {offsets = [7, 0], sizes = [1, 128], strides = [1, 1]} : vector<8x128xf32> to vector<1x128xf32>
    %82 = arith.mulf %81, %80 : vector<1x128xf32>
    %83 = vector.extract_strided_slice %52 {offsets = [7, 0], sizes = [1, 128], strides = [1, 1]} : vector<8x128xf32> to vector<1x128xf32>
    %84 = arith.addf %82, %83 : vector<1x128xf32>
    %85 = tpu.concatenate %56, %60, %64, %68, %72, %76, %80, %84 in 0 : vector<1x128xf32>, vector<1x128xf32>, vector<1x128xf32>, vector<1x128xf32>, vector<1x128xf32>, vector<1x128xf32>, vector<1x128xf32>, vector<1x128xf32> -> vector<8x128xf32>
    %86 = arith.index_cast %48 : i32 to index
    %c0_24 = arith.constant 0 : index
    %87 = vector.load %arg8[%86, %c0_24] : memref<8x128xf32, #tpu.memory_space<vmem>>, vector<8x128xf32>
    tpu.vector_store %arg8[%86, %c0_24], %85 {strides = array<i32>} : memref<8x128xf32, #tpu.memory_space<vmem>>, vector<8x128xf32>,
    %c1_i32 = arith.constant 1 : i32
    %c0_25 = arith.constant 0 : index
    %c0_26 = arith.constant 0 : index
    %88 = vector.load %arg10[%c0_25, %c0_26] : memref<1x128xf32, #tpu.memory_space<vmem>>, vector<1x128xf32>
    tpu.vector_store %arg10[%c0_25, %c0_26], %84 {strides = array<i32>} : memref<1x128xf32, #tpu.memory_space<vmem>>, vector<1x128xf32>,
    %c0_27 = arith.constant 0 : index
    %c0_28 = arith.constant 0 : index
    %89 = vector.load %arg8[%c0_27, %c0_28] : memref<8x128xf32, #tpu.memory_space<vmem>>, vector<8x128xf32>
    %90 = arith.mulf %42, %89 : vector<8x128xf32>
    %91 = arith.truncf %90 : vector<8x128xf32> to vector<8x128xbf16>
    %c0_29 = arith.constant 0 : index
    %c0_30 = arith.constant 0 : index
    %92 = vector.load %arg6[%c0_29, %c0_30] : memref<128x128xbf16, #tpu.memory_space<vmem>>, vector<128x128xbf16>
    %cst_31 = arith.constant dense<0.000000e+00> : vector<8x128xf32>
    %93 = tpu.matmul %91, %92, %cst_31 {dimension_numbers = #tpu.dot_dimension_numbers<[1], [0], [0], [1], [0, 0, 1, 1], [], []>} : vector<8x128xbf16>, vector<128x128xbf16>, vector<8x128xf32> -> vector<8x128xf32>
    %94 = arith.addf %93, %4 : vector<8x128xf32>
    %c0_32 = arith.constant 0 : index
    %c0_33 = arith.constant 0 : index
    %c0_34 = arith.constant 0 : index
    %95 = vector.load %arg7[%c0_32, %c0_33, %c0_34] : memref<1x8x128xf32, #tpu.memory_space<vmem>>, vector<1x8x128xf32>
    %96 = vector.shape_cast %95 : vector<1x8x128xf32> to vector<8x128xf32>
    %97 = vector.shape_cast %94 : vector<8x128xf32> to vector<1x8x128xf32>
    tpu.vector_store %arg7[%c0_32, %c0_33, %c0_34], %97 {strides = array<i32>} : memref<1x8x128xf32, #tpu.memory_space<vmem>>, vector<1x8x128xf32>,
    return
  }
  func.func @transform_0(%arg0: i32, %arg1: i32) -> (i32, i32, i32) {
    %c0_i32 = arith.constant 0 : i32
    %c0_i32_0 = arith.constant 0 : i32
    return %arg0, %arg1, %c0_i32 : i32, i32, i32
  }
  func.func @transform_1(%arg0: i32, %arg1: i32) -> (i32, i32) {
    %c0_i32 = arith.constant 0 : i32
    %c0_i32_0 = arith.constant 0 : i32
    %c0_i32_1 = arith.constant 0 : i32
    return %c0_i32, %c0_i32_0 : i32, i32
  }
  func.func @transform_2(%arg0: i32, %arg1: i32) -> (i32, i32) {
    %c0_i32 = arith.constant 0 : i32
    %c0_i32_0 = arith.constant 0 : i32
    %c0_i32_1 = arith.constant 0 : i32
    return %c0_i32, %c0_i32_0 : i32, i32
  }
  func.func @transform_3(%arg0: i32, %arg1: i32) -> (i32, i32) {
    %c0_i32 = arith.constant 0 : i32
    %c0_i32_0 = arith.constant 0 : i32
    %c0_i32_1 = arith.constant 0 : i32
    return %c0_i32, %c0_i32_0 : i32, i32
  }
  func.func @transform_4(%arg0: i32, %arg1: i32) -> (i32, i32) {
    %c0_i32 = arith.constant 0 : i32
    %c0_i32_0 = arith.constant 0 : i32
    %c0_i32_1 = arith.constant 0 : i32
    return %c0_i32, %c0_i32_0 : i32, i32
  }
  func.func @transform_5(%arg0: i32, %arg1: i32) -> (i32, i32, i32) {
    %c0_i32 = arith.constant 0 : i32
    %c0_i32_0 = arith.constant 0 : i32
    return %arg0, %arg1, %c0_i32 : i32, i32, i32
  }
}

</mosaic_0001>

<llo_original>
// kernel: tpu_custom_call.1
$region0: #{tpu_custom_call.1}
  #allocation0 [shape = 'u32[]', space=smem, size = 0x4, offset = 0x4, fixed_abs, tag = 'smem constant byte address 0x4 - core index']
  #allocation1 [shape = 'u32[144,128]{1,0:T(1,128)}', space=vmem, size = 0x12000, scoped, tag = 'internal scratch']
  #allocation2 [shape = 'f32[8,128]{1,0:T(8,128)}', space=vmem, size = 0x1000, scoped, tag = 'scratch operand']
  #allocation3 [shape = 'f32[8,128]{1,0:T(8,128)}', space=vmem, size = 0x1000, scoped, tag = 'scratch operand']
  #allocation4 [shape = 'f32[1,128]{1,0:T(1,128)}', space=vmem, size = 0x200, scoped, tag = 'scratch operand']
  %s0 = inlined_call_operand.hbm [shape: f32[2,16,128], index: 0, kind: input, shape index: {}]
  %s1 = inlined_call_operand.vmem [shape: f32[1,128], index: 1, kind: input, shape index: {}]
  %s2 = inlined_call_operand.hbm [shape: bf16[128,512], index: 2, kind: input, shape index: {}]
  %s3 = inlined_call_operand.vmem [shape: f32[1,512], index: 3, kind: input, shape index: {}]
  %s4 = inlined_call_operand.hbm [shape: bf16[128,128], index: 4, kind: input, shape index: {}]
  %s5 = inlined_call_operand.hbm [shape: f32[2,16,128], index: 5, kind: output, shape index: {}]
  %s6 = sld [smem:[#allocation0]]
  $region69: #{tpu_custom_call.1} parent=0
    _
  %s8 = ssub.s32 1, %s6
  %s9 = scalar_select 0, %s8, %s6
  $region1: #{tpu_custom_call.1} parent=0
    #allocation5 [shape = 'u8[8192]{0}', space=vmem, size = 0x2000, scoped, tag = 'input window, operand 0']
    #allocation6 [shape = 's32[2]{0}', space=sflag, size = 0x8, scoped, tag = 'scoped memory for tpu_custom_call.1']
    #allocation7 [shape = 's32[2]{0}', space=sflag, size = 0x8, scoped, tag = 'scoped memory for tpu_custom_call.1']
    #allocation8 [shape = 'u8[131072]{0}', space=vmem, size = 0x20000, scoped, tag = 'input window, operand 2, single buffered']
    #allocation9 [shape = 's32[1]{0}', space=sflag, size = 0x4, scoped, tag = 'scoped memory for tpu_custom_call.1']
    #allocation10 [shape = 'u8[32768]{0}', space=vmem, size = 0x8000, scoped, tag = 'input window, operand 4, single buffered']
    #allocation11 [shape = 'u8[8192]{0}', space=vmem, size = 0x2000, scoped, tag = 'output window, operand 0']
    %10 = vsyncpa [#allocation6], 0
    %s11 = scalar_lea.sflag [#allocation6], 1
    %12 = vsyncpa %s11, 0
    %13 = vsyncpa [#allocation9], 0
    %14 = vsyncpa [#allocation7], 0
    %s15 = scalar_lea.sflag [#allocation7], 1
    %16 = vsyncpa %s15, 0
    loop: start=0, step=1, limit=6
    $region2: #{tpu_custom_call.1} parent=1 // loop_pre_header
      _
    $region3: #{tpu_custom_call.1} parent=1 // loop_header
      %s18 = sphi 0, %s22
      %p19 = scmp.ge.s32.totalorder %s18, 6
      %s25 = sphi 0, %s37
      %s26 = sphi 0, %s33
      %s27 = sphi 0, %s25
      %s28 = sphi 0, %s26
      %s29 = sphi 0, %s27
      %s30 = sphi 0, %s28
      %s42 = sphi 0, %s44
      %s45 = sphi 0, %s42
      %s46 = sphi 0, %s45
      %s62 = sphi 0, %s46
      %s66 = sphi 0, %s66
      %s68 = sphi 0, %s66
      %s69 = sphi 0, %s68
      %s83 = sphi 0, %s69
      %s87 = sphi 0, %s87
      %s89 = sphi 0, %s87
      %s90 = sphi 0, %s89
      %s104 = sphi 0, %s90
      %s108 = sphi 0, %s108
      %s110 = sphi 0, %s108
      %s111 = sphi 0, %s110
      %s125 = sphi 0, %s111
      %s129 = sphi 0, %s129
      %s131 = sphi 0, %s129
      %s132 = sphi 0, %s131
      %s146 = sphi 0, %s132
      %s154 = sphi 0, %s156
      %s157 = sphi 0, %s154
      %s158 = sphi 0, %s157
      %s174 = sphi 0, %s158
    $region4: #{tpu_custom_call.1} parent=1 // loop_header_branch
      %21 = sbr.rel (%p19) target = $region8
    $region5: #{tpu_custom_call.1} parent=1 // loop_body
      %s23 = ssub.s32 %s18, 1
      %s24 = ssub.s32 %s18, 2
      %s31 = sadd.s32 1, %s26
      %p32 = scmp.ge.s32.totalorder %s31, 2
      %s33 = scalar_select %p32, 0, %s31
      %s34 = sadd.s32 1, %s25
      %s35 = scalar_select %p32, %s34, %s25
      %p36 = scmp.ge.s32.totalorder %s35, 2
      %s37 = scalar_select %p36, 0, %s35
      %s38 = ssub.s32 %s25, %s37
      %s39 = ssub.s32 %s26, %s33
      %s40 = sor.u32 %s38, %s39
      %p41 = scmp.eq.s32.totalorder %s40, 0
      %s43 = sadd.s32 %s42, 1
      %s44 = scalar_select %p41, %s42, %s43
      %p47 = pneg %p41
      %p48 = scmp.eq.s32.totalorder %s18, 3
      %p49 = por %p47, %p48
      %p50 = scmp.ne.s32.totalorder %s42, %s45
      %p51 = scmp.eq.s32.totalorder %s18, 0
      %p52 = por %p50, %p51
      %p53 = scmp.ne.s32.totalorder %s42, %s45
      %p54 = scmp.eq.s32.totalorder %s23, 3
      %p55 = por %p53, %p54
      %p56 = scmp.ne.s32.totalorder %s45, %s46
      %p57 = scmp.eq.s32.totalorder %s23, 0
      %p58 = por %p56, %p57
      %p59 = scmp.ne.s32.totalorder %s45, %s46
      %p60 = scmp.eq.s32.totalorder %s24, 3
      %p61 = por %p59, %p60
      %p63 = scmp.ne.s32.totalorder %s46, %s62
      %p64 = scmp.eq.s32.totalorder %s24, 0
      %p65 = por %p63, %p64
      %s67 = sadd.s32 %s66, 1
      %p70 = scmp.eq.s32.totalorder %s18, 3
      %p71 = scmp.ne.s32.totalorder %s66, %s68
      %p72 = scmp.eq.s32.totalorder %s18, 0
      %p73 = por %p71, %p72
      %p74 = scmp.ne.s32.totalorder %s66, %s68
      %p75 = scmp.eq.s32.totalorder %s23, 3
      %p76 = por %p74, %p75
      %p77 = scmp.ne.s32.totalorder %s68, %s69
      %p78 = scmp.eq.s32.totalorder %s23, 0
      %p79 = por %p77, %p78
      %p80 = scmp.ne.s32.totalorder %s68, %s69
      %p81 = scmp.eq.s32.totalorder %s24, 3
      %p82 = por %p80, %p81
      %p84 = scmp.ne.s32.totalorder %s69, %s83
      %p85 = scmp.eq.s32.totalorder %s24, 0
      %p86 = por %p84, %p85
      %s88 = sadd.s32 %s87, 1
      %p91 = scmp.eq.s32.totalorder %s18, 3
      %p92 = scmp.ne.s32.totalorder %s87, %s89
      %p93 = scmp.eq.s32.totalorder %s18, 0
      %p94 = por %p92, %p93
      %p95 = scmp.ne.s32.totalorder %s87, %s89
      %p96 = scmp.eq.s32.totalorder %s23, 3
      %p97 = por %p95, %p96
      %p98 = scmp.ne.s32.totalorder %s89, %s90
      %p99 = scmp.eq.s32.totalorder %s23, 0
      %p100 = por %p98, %p99
      %p101 = scmp.ne.s32.totalorder %s89, %s90
      %p102 = scmp.eq.s32.totalorder %s24, 3
      %p103 = por %p101, %p102
      %p105 = scmp.ne.s32.totalorder %s90, %s104
      %p106 = scmp.eq.s32.totalorder %s24, 0
      %p107 = por %p105, %p106
      %s109 = sadd.s32 %s108, 1
      %p112 = scmp.eq.s32.totalorder %s18, 3
      %p113 = scmp.ne.s32.totalorder %s108, %s110
      %p114 = scmp.eq.s32.totalorder %s18, 0
      %p115 = por %p113, %p114
      %p116 = scmp.ne.s32.totalorder %s108, %s110
      %p117 = scmp.eq.s32.totalorder %s23, 3
      %p118 = por %p116, %p117
      %p119 = scmp.ne.s32.totalorder %s110, %s111
      %p120 = scmp.eq.s32.totalorder %s23, 0
      %p121 = por %p119, %p120
      %p122 = scmp.ne.s32.totalorder %s110, %s111
      %p123 = scmp.eq.s32.totalorder %s24, 3
      %p124 = por %p122, %p123
      %p126 = scmp.ne.s32.totalorder %s111, %s125
      %p127 = scmp.eq.s32.totalorder %s24, 0
      %p128 = por %p126, %p127
      %s130 = sadd.s32 %s129, 1
      %p133 = scmp.eq.s32.totalorder %s18, 3
      %p134 = scmp.ne.s32.totalorder %s129, %s131
      %p135 = scmp.eq.s32.totalorder %s18, 0
      %p136 = por %p134, %p135
      %p137 = scmp.ne.s32.totalorder %s129, %s131
      %p138 = scmp.eq.s32.totalorder %s23, 3
      %p139 = por %p137, %p138
      %p140 = scmp.ne.s32.totalorder %s131, %s132
      %p141 = scmp.eq.s32.totalorder %s23, 0
      %p142 = por %p140, %p141
      %p143 = scmp.ne.s32.totalorder %s131, %s132
      %p144 = scmp.eq.s32.totalorder %s24, 3
      %p145 = por %p143, %p144
      %p147 = scmp.ne.s32.totalorder %s132, %s146
      %p148 = scmp.eq.s32.totalorder %s24, 0
      %p149 = por %p147, %p148
      %s150 = ssub.s32 %s25, %s37
      %s151 = ssub.s32 %s26, %s33
      %s152 = sor.u32 %s150, %s151
      %p153 = scmp.eq.s32.totalorder %s152, 0
      %s155 = sadd.s32 %s154, 1
      %s156 = scalar_select %p153, %s154, %s155
      %p159 = pneg %p153
      %p160 = scmp.eq.s32.totalorder %s18, 3
      %p161 = por %p159, %p160
      %p162 = scmp.ne.s32.totalorder %s154, %s157
      %p163 = scmp.eq.s32.totalorder %s18, 0
      %p164 = por %p162, %p163
      %p165 = scmp.ne.s32.totalorder %s154, %s157
      %p166 = scmp.eq.s32.totalorder %s23, 3
      %p167 = por %p165, %p166
      %p168 = scmp.ne.s32.totalorder %s157, %s158
      %p169 = scmp.eq.s32.totalorder %s23, 0
      %p170 = por %p168, %p169
      %p171 = scmp.ne.s32.totalorder %s157, %s158
      %p172 = scmp.eq.s32.totalorder %s24, 3
      %p173 = por %p171, %p172
      %p175 = scmp.ne.s32.totalorder %s158, %s174
      %p176 = scmp.eq.s32.totalorder %s24, 0
      %p177 = por %p175, %p176
      %p178 = scmp.le.s32.totalorder 1, %s18
      %p179 = scmp.lt.s32.totalorder %s18, 5
      %p180 = pnand %p178, %p179
      %p181 = pneg %p180
      // Predicated region
      $region9: #{tpu_custom_call.1} parent=5 // pred_check
        _
      $region10: #{tpu_custom_call.1} parent=5 // pred_check_branch
        %183 = sbr.rel (%p180) target = $region12
      $region11: #{tpu_custom_call.1} parent=5 // pred_region
        %s184 = ssub.s32 %s18, 1
        // Predicated region
        $region13: #{tpu_custom_call.1} parent=11 // pred_check
          %p185 = pneg %p79
        $region14: #{tpu_custom_call.1} parent=11 // pred_check_branch
          %187 = sbr.rel (%p185) target = $region16
        $region15: #{tpu_custom_call.1} parent=11 // pred_region
          _
        $region16: #{tpu_custom_call.1} parent=11 // pred_fallthru
          _
        // Predicated region
        $region17: #{tpu_custom_call.1} parent=11 // pred_check
          %p188 = pneg %p100
        $region18: #{tpu_custom_call.1} parent=11 // pred_check_branch
          %190 = sbr.rel (%p188) target = $region20
        $region19: #{tpu_custom_call.1} parent=11 // pred_region
          %s192 = ssub.s32 4096, 4096
          %193 = vsyncadd [#allocation9], %s192
          %s194 = sshll.u32 [#allocation8], 4
          %s195 = int_to_ptr.vmem [resolvable:$true] %s194
          %200 = dma.hbm_to_vmem [thread:$0]  %s2, 4096, %s195, [#allocation9], 256, 256, 16
        $region20: #{tpu_custom_call.1} parent=11 // pred_fallthru
          _
        // Predicated region
        $region21: #{tpu_custom_call.1} parent=11 // pred_check
          %p201 = pneg %p121
        $region22: #{tpu_custom_call.1} parent=11 // pred_check_branch
          %203 = sbr.rel (%p201) target = $region24
        $region23: #{tpu_custom_call.1} parent=11 // pred_region
          _
        $region24: #{tpu_custom_call.1} parent=11 // pred_fallthru
          _
        // Predicated region
        $region25: #{tpu_custom_call.1} parent=11 // pred_check
          %p204 = pneg %p142
        $region26: #{tpu_custom_call.1} parent=11 // pred_check_branch
          %206 = sbr.rel (%p204) target = $region28
        $region27: #{tpu_custom_call.1} parent=11 // pred_region
          %s208 = ssub.s32 1024, 1024
          %209 = vsyncadd [#allocation9], %s208
          %s210 = sshll.u32 [#allocation10], 4
          %s211 = int_to_ptr.vmem [resolvable:$true] %s210
          %216 = dma.hbm_to_vmem [thread:$0]  %s4, 1024, %s211, [#allocation9], 64, 64, 4
        $region28: #{tpu_custom_call.1} parent=11 // pred_fallthru
          _
      $region12: #{tpu_custom_call.1} parent=5 // pred_fallthru
        _
      %p217 = scmp.lt.s32.totalorder %s18, 4
      // Predicated region
      $region29: #{tpu_custom_call.1} parent=5 // pred_check
        %p218 = pneg %p217
      $region30: #{tpu_custom_call.1} parent=5 // pred_check_branch
        %220 = sbr.rel (%p218) target = $region32
      $region31: #{tpu_custom_call.1} parent=5 // pred_region
        // Predicated region
        $region33: #{tpu_custom_call.1} parent=31 // pred_check
          %p221 = pneg %p52
        $region34: #{tpu_custom_call.1} parent=31 // pred_check_branch
          %223 = sbr.rel (%p221) target = $region36
        $region35: #{tpu_custom_call.1} parent=31 // pred_region
          %s224 = sand.u32 %s42, 1
          %s225 = scalar_lea.sflag [#allocation6], %s224
          %s226 = sand.u32 %s42, 1
          %s227 = smul.addr %s226, 8
          %s228 = scalar_lea.vmem [#allocation5], %s227
          %s230 = ssub.s32 128, 128
          %231 = vsyncadd %s225, %s230
          %s232 = smul.addr %s25, 2
          %s233 = sadd.s32 %s26, %s232
          %s234 = smul.addr %s233, 128
          %s235 = scalar_lea.hbm %s0, %s234
          %s237 = sshll.u32 %s228, 4
          %s238 = int_to_ptr.vmem [resolvable:$true] %s237
          %240 = dma.hbm_to_vmem [thread:$0]  %s235, 128, %s238, %s225
        $region36: #{tpu_custom_call.1} parent=31 // pred_fallthru
          _
      $region32: #{tpu_custom_call.1} parent=5 // pred_fallthru
        _
      %p241 = scmp.le.s32.totalorder 1, %s18
      %p242 = scmp.lt.s32.totalorder %s18, 5
      %p243 = pnand %p241, %p242
      %p244 = pneg %p243
      // Predicated region
      $region37: #{tpu_custom_call.1} parent=5 // pred_check
        _
      $region38: #{tpu_custom_call.1} parent=5 // pred_check_branch
        %246 = sbr.rel (%p243) target = $region40
      $region39: #{tpu_custom_call.1} parent=5 // pred_region
        %s247 = ssub.s32 %s18, 1
        %s248 = sand.u32 %s45, 1
        %s249 = scalar_lea.sflag [#allocation6], %s248
        %s250 = sand.u32 %s45, 1
        %s251 = smul.addr %s250, 8
        %s252 = scalar_lea.vmem [#allocation5], %s251
        // Predicated region
        $region41: #{tpu_custom_call.1} parent=39 // pred_check
          %p253 = pneg %p58
        $region42: #{tpu_custom_call.1} parent=39 // pred_check_branch
          %255 = sbr.rel (%p253) target = $region44
        $region43: #{tpu_custom_call.1} parent=39 // pred_region
          %256 = dma.done %s249, 128
        $region44: #{tpu_custom_call.1} parent=39 // pred_fallthru
          _
        // Predicated region
        $region45: #{tpu_custom_call.1} parent=39 // pred_check
          %p257 = pneg %p100
        $region46: #{tpu_custom_call.1} parent=39 // pred_check_branch
          %259 = sbr.rel (%p257) target = $region48
        $region47: #{tpu_custom_call.1} parent=39 // pred_region
          %260 = dma.done [#allocation9], 4096
        $region48: #{tpu_custom_call.1} parent=39 // pred_fallthru
          _
        // Predicated region
        $region49: #{tpu_custom_call.1} parent=39 // pred_check
          %p261 = pneg %p142
        $region50: #{tpu_custom_call.1} parent=39 // pred_check_branch
          %263 = sbr.rel (%p261) target = $region52
        $region51: #{tpu_custom_call.1} parent=39 // pred_region
          %264 = dma.done [#allocation9], 1024
        $region52: #{tpu_custom_call.1} parent=39 // pred_fallthru
          _
        %s265 = sand.u32 %s45, 1
        %s266 = scalar_lea.sflag [#allocation6], %s265
        %s267 = sand.u32 %s45, 1
        %s268 = smul.addr %s267, 8
        %s269 = scalar_lea.vmem [#allocation5], %s268
        %p270 = pneg %p58
        %p271 = pneg %p55
        %p272 = pneg %p79
        %p273 = pneg %p76
        %p274 = pneg %p100
        %p275 = pneg %p97
        %p276 = pneg %p121
        %p277 = pneg %p118
        %p278 = pneg %p142
        %p279 = pneg %p139
        %p280 = pneg %p170
        %p281 = pneg %p167
        %s282 = sand.u32 %s157, 1
        %s283 = scalar_lea.sflag [#allocation7], %s282
        %s284 = sand.u32 %s157, 1
        %s285 = smul.addr %s284, 8
        %s286 = scalar_lea.vmem [#allocation11], %s285
        %p288 = scmp.eq.s32.totalorder %s28, 0
        // Predicated region
        $region53: #{tpu_custom_call.1} parent=39 // pred_check
          %p289 = pneg %p288
        $region54: #{tpu_custom_call.1} parent=39 // pred_check_branch
          %291 = sbr.rel (%p289) target = $region56
        $region55: #{tpu_custom_call.1} parent=39 // pred_region
          %292 = vst [vmem:[#allocation4] sm:$0x1] 0.0
        $region56: #{tpu_custom_call.1} parent=39 // pred_fallthru
          _
        %v293 = vld [vmem:[%s252] sm:$0xff]
        %v294 = vmul.f32 %v293, %v293
        %295 = vadd.xlane.f32.xlu0 %v294
        %v296 = vpop.xlane.xlu0 %295
        %v297 = vrcp.pop 128.0
        %v298 = vmul.f32 %v296, %v297
        %v299 = vadd.f32 %v298, 1e-05
        %v300 = vrsqrt.pop %v299
        %v301 = vmul.f32 %v293, %v300
        %v302 = vld [vmem:[%s1] sm:$0x1]
        %v304 = vlaneseq
        %v305 = vshrl.u32 %v304, 7
        %v306 = vsub.s32 0, %v305
        %v307 = vrot.slane %v302, %v306
        %v309 = vmul.f32 %v301, %v307
        %v310 = vpack.c.bf16 %v309, %v309
        %v311 = vld [vmem:[#allocation8] sm:$0xff]
        %v312 = vld [vmem:[#allocation8 + $0x8] sm:$0xff]
        %v313 = vld [vmem:[#allocation8 + $0x10] sm:$0xff]
        %v314 = vld [vmem:[#allocation8 + $0x18] sm:$0xff]
        %v315 = vld [vmem:[#allocation8 + $0x20] sm:$0xff]
        %v316 = vld [vmem:[#allocation8 + $0x28] sm:$0xff]
        %v317 = vld [vmem:[#allocation8 + $0x30] sm:$0xff]
        %v318 = vld [vmem:[#allocation8 + $0x38] sm:$0xff]
        %v319 = vld [vmem:[#allocation8 + $0x40] sm:$0xff]
        %v320 = vld [vmem:[#allocation8 + $0x48] sm:$0xff]
        %v321 = vld [vmem:[#allocation8 + $0x50] sm:$0xff]
        %v322 = vld [vmem:[#allocation8 + $0x58] sm:$0xff]
        %v323 = vld [vmem:[#allocation8 + $0x60] sm:$0xff]
        %v324 = vld [vmem:[#allocation8 + $0x68] sm:$0xff]
        %v325 = vld [vmem:[#allocation8 + $0x70] sm:$0xff]
        %v326 = vld [vmem:[#allocation8 + $0x78] sm:$0xff]
        %v327 = vld [vmem:[#allocation8 + $0x80] sm:$0xff]
        %v328 = vld [vmem:[#allocation8 + $0x88] sm:$0xff]
        %v329 = vld [vmem:[#allocation8 + $0x90] sm:$0xff]
        %v330 = vld [vmem:[#allocation8 + $0x98] sm:$0xff]
        %v331 = vld [vmem:[#allocation8 + $0xa0] sm:$0xff]
        %v332 = vld [vmem:[#allocation8 + $0xa8] sm:$0xff]
        %v333 = vld [vmem:[#allocation8 + $0xb0] sm:$0xff]
        %v334 = vld [vmem:[#allocation8 + $0xb8] sm:$0xff]
        %v335 = vld [vmem:[#allocation8 + $0xc0] sm:$0xff]
        %v336 = vld [vmem:[#allocation8 + $0xc8] sm:$0xff]
        %v337 = vld [vmem:[#allocation8 + $0xd0] sm:$0xff]
        %v338 = vld [vmem:[#allocation8 + $0xd8] sm:$0xff]
        %v339 = vld [vmem:[#allocation8 + $0xe0] sm:$0xff]
        %v340 = vld [vmem:[#allocation8 + $0xe8] sm:$0xff]
        %v341 = vld [vmem:[#allocation8 + $0xf0] sm:$0xff]
        %v342 = vld [vmem:[#allocation8 + $0xf8] sm:$0xff]
        %v343 = vld [vmem:[%s3] sm:$0xf]
        %v345 = vlaneseq
        %v346 = vshrl.u32 %v345, 7
        %v347 = vsub.s32 0, %v346
        %v348 = vrot.slane %v343, %v347
        %v349 = vlaneseq
        %v350 = vshrl.u32 %v349, 7
        %v351 = vsub.s32 1, %v350
        %v352 = vrot.slane %v343, %v351
        %v353 = vlaneseq
        %v354 = vshrl.u32 %v353, 7
        %v355 = vsub.s32 2, %v354
        %v356 = vrot.slane %v343, %v355
        %v357 = vlaneseq
        %v358 = vshrl.u32 %v357, 7
        %v359 = vsub.s32 3, %v358
        %v360 = vrot.slane %v343, %v359
        %v397 = vunpack.c.l.b16 %v311
        %v398 = vunpack.c.h.b16 %v311
        %v399 = vunpack.c.l.b16 %v312
        %v400 = vunpack.c.h.b16 %v312
        %v401 = vunpack.c.l.b16 %v313
        %v402 = vunpack.c.h.b16 %v313
        %v403 = vunpack.c.l.b16 %v314
        %v404 = vunpack.c.h.b16 %v314
        %v405 = vunpack.c.l.b16 %v315
        %v406 = vunpack.c.h.b16 %v315
        %v407 = vunpack.c.l.b16 %v316
        %v408 = vunpack.c.h.b16 %v316
        %v409 = vunpack.c.l.b16 %v317
        %v410 = vunpack.c.h.b16 %v317
        %v411 = vunpack.c.l.b16 %v318
        %v412 = vunpack.c.h.b16 %v318
        %v413 = vunpack.c.l.b16 %v319
        %v414 = vunpack.c.h.b16 %v319
        %v415 = vunpack.c.l.b16 %v320
        %v416 = vunpack.c.h.b16 %v320
        %v417 = vunpack.c.l.b16 %v321
        %v418 = vunpack.c.h.b16 %v321
        %v419 = vunpack.c.l.b16 %v322
        %v420 = vunpack.c.h.b16 %v322
        %v421 = vunpack.c.l.b16 %v323
        %v422 = vunpack.c.h.b16 %v323
        %v423 = vunpack.c.l.b16 %v324
        %v424 = vunpack.c.h.b16 %v324
        %v425 = vunpack.c.l.b16 %v325
        %v426 = vunpack.c.h.b16 %v325
        %v427 = vunpack.c.l.b16 %v326
        %v428 = vunpack.c.h.b16 %v326
        %v429 = vunpack.c.l.b16 %v327
        %v430 = vunpack.c.h.b16 %v327
        %v431 = vunpack.c.l.b16 %v328
        %v432 = vunpack.c.h.b16 %v328
        %v433 = vunpack.c.l.b16 %v329
        %v434 = vunpack.c.h.b16 %v329
        %v435 = vunpack.c.l.b16 %v330
        %v436 = vunpack.c.h.b16 %v330
        %v437 = vunpack.c.l.b16 %v331
        %v438 = vunpack.c.h.b16 %v331
        %v439 = vunpack.c.l.b16 %v332
        %v440 = vunpack.c.h.b16 %v332
        %v441 = vunpack.c.l.b16 %v333
        %v442 = vunpack.c.h.b16 %v333
        %v443 = vunpack.c.l.b16 %v334
        %v444 = vunpack.c.h.b16 %v334
        %v445 = vunpack.c.l.b16 %v335
        %v446 = vunpack.c.h.b16 %v335
        %v447 = vunpack.c.l.b16 %v336
        %v448 = vunpack.c.h.b16 %v336
        %v449 = vunpack.c.l.b16 %v337
        %v450 = vunpack.c.h.b16 %v337
        %v451 = vunpack.c.l.b16 %v338
        %v452 = vunpack.c.h.b16 %v338
        %v453 = vunpack.c.l.b16 %v339
        %v454 = vunpack.c.h.b16 %v339
        %v455 = vunpack.c.l.b16 %v340
        %v456 = vunpack.c.h.b16 %v340
        %v457 = vunpack.c.l.b16 %v341
        %v458 = vunpack.c.h.b16 %v341
        %v459 = vunpack.c.l.b16 %v342
        %v460 = vunpack.c.h.b16 %v342
        %v461 = vpack.c.b16 %v401, %v397
        %v462 = vpack.c.b16 %v402, %v398
        %v463 = vpack.c.b16 %v403, %v399
        %v464 = vpack.c.b16 %v404, %v400
        %v465 = vpack.c.b16 %v409, %v405
        %v466 = vpack.c.b16 %v410, %v406
        %v467 = vpack.c.b16 %v411, %v407
        %v468 = vpack.c.b16 %v412, %v408
        %v469 = vpack.c.b16 %v417, %v413
        %v470 = vpack.c.b16 %v418, %v414
        %v471 = vpack.c.b16 %v419, %v415
        %v472 = vpack.c.b16 %v420, %v416
        %v473 = vpack.c.b16 %v425, %v421
        %v474 = vpack.c.b16 %v426, %v422
        %v475 = vpack.c.b16 %v427, %v423
        %v476 = vpack.c.b16 %v428, %v424
        %v477 = vpack.c.b16 %v433, %v429
        %v478 = vpack.c.b16 %v434, %v430
        %v479 = vpack.c.b16 %v435, %v431
        %v480 = vpack.c.b16 %v436, %v432
        %v481 = vpack.c.b16 %v441, %v437
        %v482 = vpack.c.b16 %v442, %v438
        %v483 = vpack.c.b16 %v443, %v439
        %v484 = vpack.c.b16 %v444, %v440
        %v485 = vpack.c.b16 %v449, %v445
        %v486 = vpack.c.b16 %v450, %v446
        %v487 = vpack.c.b16 %v451, %v447
        %v488 = vpack.c.b16 %v452, %v448
        %v489 = vpack.c.b16 %v457, %v453
        %v490 = vpack.c.b16 %v458, %v454
        %v491 = vpack.c.b16 %v459, %v455
        %v492 = vpack.c.b16 %v460, %v456
        %525 = vmatprep.subr.bf16.mxu0 %v462
        %526 = vmatpush1.bf16.msra.mxu0 %v461
        %527 = vmatprep.subr.bf16.mxu0 %v466
        %528 = vmatpush1.bf16.msra.mxu0 %v465
        %529 = vmatprep.subr.bf16.mxu0 %v470
        %530 = vmatpush1.bf16.msra.mxu0 %v469
        %531 = vmatprep.subr.bf16.mxu0 %v474
        %532 = vmatpush1.bf16.msra.mxu0 %v473
        %533 = vmatprep.subr.bf16.mxu0 %v478
        %534 = vmatpush1.bf16.msra.mxu0 %v477
        %535 = vmatprep.subr.bf16.mxu0 %v482
        %536 = vmatpush1.bf16.msra.mxu0 %v481
        %537 = vmatprep.subr.bf16.mxu0 %v486
        %538 = vmatpush1.bf16.msra.mxu0 %v485
        %539 = vmatprep.subr.bf16.mxu0 %v490
        %540 = vmatpush1.bf16.msra.mxu0 %v489
        %541 = vmatprep.subr.bf16.mxu0 0
        %542 = vmatpush1.bf16.msra.mxu0 0
        %543 = vmatprep.subr.bf16.mxu0 0
        %544 = vmatpush1.bf16.msra.mxu0 0
        %545 = vmatprep.subr.bf16.mxu0 0
        %546 = vmatpush1.bf16.msra.mxu0 0
        %547 = vmatprep.subr.bf16.mxu0 0
        %548 = vmatpush1.bf16.msra.mxu0 0
        %549 = vmatprep.subr.bf16.mxu0 0
        %550 = vmatpush1.bf16.msra.mxu0 0
        %551 = vmatprep.subr.bf16.mxu0 0
        %552 = vmatpush1.bf16.msra.mxu0 0
        %553 = vmatprep.subr.bf16.mxu0 0
        %554 = vmatpush1.bf16.msra.mxu0 0
        %555 = vmatprep.subr.bf16.mxu0 0
        %556 = vmatpush1.bf16.msra.mxu0 0
        %557 = vmatprep.mubr.bf16.mxu0 0
        %558 = vmatmul.mubr.bf16.gmra.mrb[0].mxu0 %v310
        %v559 = vpop.f32.mrb[0].mxu0
        %v560 = vadd.f32 %v348, %v559
        %v561 = vpop.f32.mrb[0].mxu0
        %v562 = vadd.f32 %v352, %v561
        %v563 = vpop.f32.mrb[0].mxu0
        %v564 = vpop.f32.mrb[0].mxu0
        %565 = vdwg.mxu0
        %566 = vmatprep.subr.bf16.mxu0 %v464
        %567 = vmatpush1.bf16.msra.mxu0 %v463
        %568 = vmatprep.subr.bf16.mxu0 %v468
        %569 = vmatpush1.bf16.msra.mxu0 %v467
        %570 = vmatprep.subr.bf16.mxu0 %v472
        %571 = vmatpush1.bf16.msra.mxu0 %v471
        %572 = vmatprep.subr.bf16.mxu0 %v476
        %573 = vmatpush1.bf16.msra.mxu0 %v475
        %574 = vmatprep.subr.bf16.mxu0 %v480
        %575 = vmatpush1.bf16.msra.mxu0 %v479
        %576 = vmatprep.subr.bf16.mxu0 %v484
        %577 = vmatpush1.bf16.msra.mxu0 %v483
        %578 = vmatprep.subr.bf16.mxu0 %v488
        %579 = vmatpush1.bf16.msra.mxu0 %v487
        %580 = vmatprep.subr.bf16.mxu0 %v492
        %581 = vmatpush1.bf16.msra.mxu0 %v491
        %582 = vmatprep.subr.bf16.mxu0 0
        %583 = vmatpush1.bf16.msra.mxu0 0
        %584 = vmatprep.subr.bf16.mxu0 0
        %585 = vmatpush1.bf16.msra.mxu0 0
        %586 = vmatprep.subr.bf16.mxu0 0
        %587 = vmatpush1.bf16.msra.mxu0 0
        %588 = vmatprep.subr.bf16.mxu0 0
        %589 = vmatpush1.bf16.msra.mxu0 0
        %590 = vmatprep.subr.bf16.mxu0 0
        %591 = vmatpush1.bf16.msra.mxu0 0
        %592 = vmatprep.subr.bf16.mxu0 0
        %593 = vmatpush1.bf16.msra.mxu0 0
        %594 = vmatprep.subr.bf16.mxu0 0
        %595 = vmatpush1.bf16.msra.mxu0 0
        %596 = vmatprep.subr.bf16.mxu0 0
        %597 = vmatpush1.bf16.msra.mxu0 0
        %598 = vmatprep.mubr.bf16.mxu0 0
        %599 = vmatmul.mubr.bf16.gmra.mrb[0].mxu0 %v310
        %v600 = vpop.f32.mrb[0].mxu0
        %v601 = vadd.f32 %v356, %v600
        %v602 = vpop.f32.mrb[0].mxu0
        %v603 = vadd.f32 %v360, %v602
        %v604 = vpop.f32.mrb[0].mxu0
        %v605 = vpop.f32.mrb[0].mxu0
        %606 = vdwg.mxu0
        %v607 = vxor.u32 %v560, 2147483648
        %v608 = vmul.f32 %v607, 1.442695
        %v609 = vpow.pop %v608
        %v610 = vadd.f32 %v609, 1.0
        %v611 = vrcp.pop %v610
        %v612 = vmul.f32 1.0, %v611
        %v613 = vxor.u32 %v601, 2147483648
        %v614 = vmul.f32 %v613, 1.442695
        %v615 = vpow.pop %v614
        %v616 = vadd.f32 %v615, 1.0
        %v617 = vrcp.pop %v616
        %v618 = vmul.f32 1.0, %v617
        %v619 = vxor.u32 %v603, 2147483648
        %v620 = vmul.f32 %v619, 1.442695
        %v621 = vpow.pop %v620
        %v622 = vadd.f32 %v621, 1.0
        %v623 = vrcp.pop %v622
        %v624 = vmul.f32 1.0, %v623
        %625 = vst [vmem:[#allocation2] sm:$0xff] %v612
        %v626 = vmul.f32 %v618, %v562
        %627 = vst [vmem:[#allocation3] sm:$0xff] %v626
        %v628 = vld [vmem:[#allocation4] sm:$0x1]
        %v629 = vld [vmem:[#allocation2] sm:$0xff]
        %v630 = vld [vmem:[#allocation3] sm:$0xff]
        %v631 = vmul.f32 %v629, %v628
        %v632 = vadd.f32 %v631, %v630
        %v634 = vrot.slane %v632, 7
        %v636 = vmul.f32 %v629, %v634
        %v637 = vadd.f32 %v636, %v630
        %v639 = vrot.slane %v637, 7
        %v641 = vmul.f32 %v629, %v639
        %v642 = vadd.f32 %v641, %v630
        %v644 = vrot.slane %v642, 7
        %v646 = vmul.f32 %v629, %v644
        %v647 = vadd.f32 %v646, %v630
        %v649 = vrot.slane %v647, 7
        %v651 = vmul.f32 %v629, %v649
        %v652 = vadd.f32 %v651, %v630
        %v654 = vrot.slane %v652, 7
        %v656 = vmul.f32 %v629, %v654
        %v657 = vadd.f32 %v656, %v630
        %v659 = vrot.slane %v657, 7
        %v661 = vmul.f32 %v629, %v659
        %v662 = vadd.f32 %v661, %v630
        %v664 = vrot.slane %v662, 7
        %v666 = vmul.f32 %v629, %v664
        %v667 = vadd.f32 %v666, %v630
        %vm668 = vcmask 1040384
        %v669 = vsel %vm668, %v632, %v637
        %vm670 = vcmask 1041408
        %v671 = vsel %vm670, %v669, %v642
        %vm672 = vcmask 1042432
        %v673 = vsel %vm672, %v671, %v647
        %vm674 = vcmask 1043456
        %v675 = vsel %vm674, %v673, %v652
        %vm676 = vcmask 1044480
        %v677 = vsel %vm676, %v675, %v657
        %vm678 = vcmask 1045504
        %v679 = vsel %vm678, %v677, %v662
        %vm680 = vcmask 1046528
        %v681 = vsel %vm680, %v679, %v667
        %682 = vst [vmem:[#allocation2] sm:$0xff] %v681
        %683 = vst [vmem:[#allocation4 - $0x7] sm:$0x80] %v667
        %v684 = vld [vmem:[#allocation2] sm:$0xff]
        %v685 = vmul.f32 %v624, %v684
        %v686 = vpack.c.bf16 %v685, %v685
        %v687 = vld [vmem:[#allocation10] sm:$0xf]
        %v688 = vld [vmem:[#allocation10 + $0x4] sm:$0xf]
        %v689 = vld [vmem:[#allocation10 + $0x8] sm:$0xf]
        %v690 = vld [vmem:[#allocation10 + $0xc] sm:$0xf]
        %v691 = vld [vmem:[#allocation10 + $0x10] sm:$0xf]
        %v692 = vld [vmem:[#allocation10 + $0x14] sm:$0xf]
        %v693 = vld [vmem:[#allocation10 + $0x18] sm:$0xf]
        %v694 = vld [vmem:[#allocation10 + $0x1c] sm:$0xf]
        %v695 = vld [vmem:[#allocation10 + $0x20] sm:$0xf]
        %v696 = vld [vmem:[#allocation10 + $0x24] sm:$0xf]
        %v697 = vld [vmem:[#allocation10 + $0x28] sm:$0xf]
        %v698 = vld [vmem:[#allocation10 + $0x2c] sm:$0xf]
        %v699 = vld [vmem:[#allocation10 + $0x30] sm:$0xf]
        %v700 = vld [vmem:[#allocation10 + $0x34] sm:$0xf]
        %v701 = vld [vmem:[#allocation10 + $0x38] sm:$0xf]
        %v702 = vld [vmem:[#allocation10 + $0x3c] sm:$0xf]
        %v719 = vunpack.c.l.b16 %v687
        %v720 = vunpack.c.l.b16 %v688
        %v721 = vunpack.c.l.b16 %v689
        %v722 = vunpack.c.l.b16 %v690
        %v723 = vunpack.c.l.b16 %v691
        %v724 = vunpack.c.l.b16 %v692
        %v725 = vunpack.c.l.b16 %v693
        %v726 = vunpack.c.l.b16 %v694
        %v727 = vunpack.c.l.b16 %v695
        %v728 = vunpack.c.l.b16 %v696
        %v729 = vunpack.c.l.b16 %v697
        %v730 = vunpack.c.l.b16 %v698
        %v731 = vunpack.c.l.b16 %v699
        %v732 = vunpack.c.l.b16 %v700
        %v733 = vunpack.c.l.b16 %v701
        %v734 = vunpack.c.l.b16 %v702
        %v735 = vpack.c.b16 %v720, %v719
        %v736 = vpack.c.b16 %v722, %v721
        %v737 = vpack.c.b16 %v724, %v723
        %v738 = vpack.c.b16 %v726, %v725
        %v739 = vpack.c.b16 %v728, %v727
        %v740 = vpack.c.b16 %v730, %v729
        %v741 = vpack.c.b16 %v732, %v731
        %v742 = vpack.c.b16 %v734, %v733
        %751 = vmatprep.subr.bf16.mxu0 0
        %752 = vmatpush1.bf16.msra.mxu0 %v735
        %753 = vmatprep.subr.bf16.mxu0 0
        %754 = vmatpush1.bf16.msra.mxu0 %v736
        %755 = vmatprep.subr.bf16.mxu0 0
        %756 = vmatpush1.bf16.msra.mxu0 %v737
        %757 = vmatprep.subr.bf16.mxu0 0
        %758 = vmatpush1.bf16.msra.mxu0 %v738
        %759 = vmatprep.subr.bf16.mxu0 0
        %760 = vmatpush1.bf16.msra.mxu0 %v739
        %761 = vmatprep.subr.bf16.mxu0 0
        %762 = vmatpush1.bf16.msra.mxu0 %v740
        %763 = vmatprep.subr.bf16.mxu0 0
        %764 = vmatpush1.bf16.msra.mxu0 %v741
        %765 = vmatprep.subr.bf16.mxu0 0
        %766 = vmatpush1.bf16.msra.mxu0 %v742
        %767 = vmatprep.subr.bf16.mxu0 0
        %768 = vmatpush1.bf16.msra.mxu0 0
        %769 = vmatprep.subr.bf16.mxu0 0
        %770 = vmatpush1.bf16.msra.mxu0 0
        %771 = vmatprep.subr.bf16.mxu0 0
        %772 = vmatpush1.bf16.msra.mxu0 0
        %773 = vmatprep.subr.bf16.mxu0 0
        %774 = vmatpush1.bf16.msra.mxu0 0
        %775 = vmatprep.subr.bf16.mxu0 0
        %776 = vmatpush1.bf16.msra.mxu0 0
        %777 = vmatprep.subr.bf16.mxu0 0
        %778 = vmatpush1.bf16.msra.mxu0 0
        %779 = vmatprep.subr.bf16.mxu0 0
        %780 = vmatpush1.bf16.msra.mxu0 0
        %781 = vmatprep.subr.bf16.mxu0 0
        %782 = vmatpush1.bf16.msra.mxu0 0
        %783 = vmatprep.mubr.bf16.mxu0 0
        %784 = vmatmul.mubr.bf16.gmra.mrb[0].mxu0 %v686
        %v785 = vpop.f32.mrb[0].mxu0
        %v786 = vadd.f32 %v293, %v785
        %v787 = vpop.f32.mrb[0].mxu0
        %v788 = vpop.f32.mrb[0].mxu0
        %v789 = vpop.f32.mrb[0].mxu0
        %790 = vdwg.mxu0
        %791 = vst [vmem:[%s286] sm:$0xff] %v786
        %s792 = sand.u32 %s157, 1
        %s793 = scalar_lea.sflag [#allocation7], %s792
        %s794 = sand.u32 %s157, 1
        %s795 = smul.addr %s794, 8
        %s796 = scalar_lea.vmem [#allocation11], %s795
        // Predicated region
        $region57: #{tpu_custom_call.1} parent=39 // pred_check
          %p797 = pneg %p167
        $region58: #{tpu_custom_call.1} parent=39 // pred_check_branch
          %799 = sbr.rel (%p797) target = $region60
        $region59: #{tpu_custom_call.1} parent=39 // pred_region
          %s801 = ssub.s32 128, 128
          %802 = vsyncadd %s793, %s801
          %s803 = smul.addr %s27, 2
          %s804 = sadd.s32 %s28, %s803
          %s805 = smul.addr %s804, 128
          %s806 = scalar_lea.hbm %s5, %s805
          %s808 = sshll.u32 %s796, 4
          %s809 = int_to_ptr.vmem [resolvable:$true] %s808
          %811 = dma.vmem_to_hbm [thread:$0]  %s809, 128, %s806, %s793
        $region60: #{tpu_custom_call.1} parent=39 // pred_fallthru
          _
      $region40: #{tpu_custom_call.1} parent=5 // pred_fallthru
        _
      %p812 = scmp.le.s32.totalorder 2, %s18
      // Predicated region
      $region61: #{tpu_custom_call.1} parent=5 // pred_check
        %p813 = pneg %p812
      $region62: #{tpu_custom_call.1} parent=5 // pred_check_branch
        %815 = sbr.rel (%p813) target = $region64
      $region63: #{tpu_custom_call.1} parent=5 // pred_region
        %s816 = ssub.s32 %s18, 2
        // Predicated region
        $region65: #{tpu_custom_call.1} parent=63 // pred_check
          %p817 = pneg %p173
        $region66: #{tpu_custom_call.1} parent=63 // pred_check_branch
          %819 = sbr.rel (%p817) target = $region68
        $region67: #{tpu_custom_call.1} parent=63 // pred_region
          %s820 = sand.u32 %s158, 1
          %s821 = scalar_lea.sflag [#allocation7], %s820
          %s822 = sand.u32 %s158, 1
          %s823 = smul.addr %s822, 8
          %s824 = scalar_lea.vmem [#allocation11], %s823
          %825 = dma.done %s821, 128
        $region68: #{tpu_custom_call.1} parent=63 // pred_fallthru
          _
      $region64: #{tpu_custom_call.1} parent=5 // pred_fallthru
        _
    $region6: #{tpu_custom_call.1} parent=1 // loop_footer
      %s22 = sadd.s32 1, %s18
    $region7: #{tpu_custom_call.1} parent=1 // loop_footer_branch
      %17 = sbr.rel target = $region3
    $region8: #{tpu_custom_call.1} parent=1 // loop_exit
      _
    %826 = vsyncpa [#allocation6], 1
    %s827 = scalar_lea.sflag [#allocation6], 1
    %828 = vsyncpa %s827, 1
    %829 = vsyncpa [#allocation9], 1
    %830 = vsyncpa [#allocation7], 1
    %s831 = scalar_lea.sflag [#allocation7], 1
    %832 = vsyncpa %s831, 1

</llo_original>
